<compile_context>
chip_gen: v5e
topology: v5e:2x2
jax: 0.10.0
libtpu: 0.0.40
codegen_flags: <defaults>
</compile_context>

<pallas_src>
import functools

import jax
import jax.numpy as jnp
import numpy as np
from jax import lax
from jax.experimental import pallas as pl
from jax.experimental.pallas import tpu as pltpu


# ----------------------------------------------------------------------------
# One-time probe: which direction does pltpu.roll rotate?  (np.roll convention:
# positive shift moves values toward higher lane indices.)  Removes any risk of a
# silently flipped XOR-butterfly.
# ----------------------------------------------------------------------------
_ROLL_NP_CONVENTION = None


def _roll_is_np_convention():
    global _ROLL_NP_CONVENTION
    if _ROLL_NP_CONVENTION is None:
        def probe_kernel(x_ref, o_ref):
            o_ref[...] = pltpu.roll(x_ref[...], 1, axis=1)

        x = jnp.arange(128, dtype=jnp.float32).reshape(1, 128)
        y = pl.pallas_call(
            probe_kernel,
            out_shape=jax.ShapeDtypeStruct((1, 128), jnp.float32))(x)
        first = float(jax.device_get(y)[0, 0])
        if first == 127.0:
            _ROLL_NP_CONVENTION = True
        elif first == 1.0:
            _ROLL_NP_CONVENTION = False
        else:
            raise RuntimeError(f"unexpected pltpu.roll probe result: {first}")
    return _ROLL_NP_CONVENTION


def _default_lane_width():
    """256-wide packing fills the 256x256 MXU on v6e/v7x; v5e's MXU is 128-native."""
    try:
        kind = jax.devices()[0].device_kind.lower()
    except Exception:
        return 128
    if ("v6" in kind) or ("v7" in kind) or ("7x" in kind):
        return 256
    return 128


# ----------------------------------------------------------------------------
# Pallas kernel: one EnBaseLayer for Gb slabs of TB*B destination nodes each.
#
# Packed layout (S = TB*D sublanes, L = B*D lanes):
#   hi   : (Gb, S, L)    f32   node (t,b) occupies rows [t*D:(t+1)*D], cols [b*D:(b+1)*D]
#   hj   : (Gb, S, k*L)  bf16  neighbour j of each node sits in lanes [j*L + b*D : ...]
#   L*   : (S, S)        bf16  blockdiag(W   x TB)   -- left bimap factor (sublane blocks)
#   R*   : (L, L)        bf16  blockdiag(W^T x B)    -- right bimap factor (lane blocks)
# so the per-node bilinear W @ X @ W^T is L @ X_packed @ R.
# ----------------------------------------------------------------------------
def _en_layer_kernel(hi_ref, hj_ref,
                     l1a_ref, r1a_ref, l1b_ref, r1b_ref, l2_ref, r2_ref,
                     lv1a_ref, rv1a_ref, lv1b_ref, rv1b_ref, lv2_ref, rv2_ref,
                     winf_ref, binf_ref, out_ref, *, k, D, roll_np):
    Gb, S, L = hi_ref.shape
    bf16 = jnp.bfloat16

    def mm(a, b):
        return jnp.dot(a, b, preferred_element_type=jnp.float32)

    def bimap(l_ref, r_ref, x_bf):
        # blockwise W @ X @ W^T: both MXU operands bf16, f32 accumulation throughout.
        return mm(mm(l_ref[...], x_bf).astype(bf16), r_ref[...])

    wrow = winf_ref[...]                    # (1, L) f32, lane-broadcast winf
    b_inf = binf_ref[0]                     # scalar from SMEM, hoisted out of all loops
    lane = lax.broadcasted_iota(jnp.int32, (S, L), 1)

    def block_rowsum(t):
        # Sum over each aligned D-lane block, broadcast back to every lane of the block:
        # log2(D)-step XOR butterfly on the XLU (keeps edge_inf off the saturated MXU).
        s = 1
        while s < D:
            sh_above = (L - s) if roll_np else s      # fetches value of lane (l + s)
            sh_below = s if roll_np else (L - s)      # fetches value of lane (l - s)
            above = pltpu.roll(t, sh_above, axis=1)
            below = pltpu.roll(t, sh_below, axis=1)
            t = t + jnp.where((lane & s) == 0, above, below)
            s *= 2
        return t

    @pl.loop(0, Gb)
    def _(gb):
        hi_f32 = hi_ref[gb]                           # (S, L) f32
        hi_bf = hi_f32.astype(bf16)
        hj_all = hj_ref[gb]                           # (S, k*L) bf16

        # edge_mlp layer 1: centre-node term hoisted out of the k-loop; all k neighbour
        # left-multiplies fused into a single (S,S)@(S,k*L) matmul.
        term_a = bimap(l1a_ref, r1a_ref, hi_bf)                     # (S, L) f32
        lhj = mm(l1b_ref[...], hj_all).astype(bf16)                 # (S, k*L) bf16

        acc = jnp.zeros((S, L), jnp.float32)
        for j in range(k):                            # k is small & static -> unroll
            m1 = jnp.maximum(term_a + mm(lhj[:, j * L:(j + 1) * L], r1b_ref[...]), 0.0)
            mij = jnp.maximum(bimap(l2_ref, r2_ref, m1.astype(bf16)), 0.0)
            # edge_inf: sigmoid(mij @ winf + b), broadcast over each block's lanes,
            # computed on VPU/XLU/EUP while the MXU stays busy with the bimaps.
            eij = jax.nn.sigmoid(block_rowsum(mij * wrow) + b_inf)
            # scatter_sum(mij * eij, dst): edges are grouped per dst -> plain accumulation
            acc = acc + mij * eij

        # node_mlp (SPDMLP) on Feature_Joint(mi, h) = blockdiag(mi, h)
        n1 = jnp.maximum(bimap(lv1a_ref, rv1a_ref, acc.astype(bf16))
                         + bimap(lv1b_ref, rv1b_ref, hi_bf), 0.0)
        n2 = bimap(lv2_ref, rv2_ref, n1.astype(bf16))
        out_ref[gb] = (hi_f32 + n2).astype(out_ref.dtype)           # residual update


# ----------------------------------------------------------------------------
# Wrapper: host-side packing, block-diagonal weight prep, pallas_call.
# ----------------------------------------------------------------------------
def _bdiag(w, n):
    """blockdiag(w, ..., w) with n repeats: (a, b) -> (n*a, n*b)."""
    a, b = w.shape
    eye = jnp.eye(n, dtype=w.dtype)
    return (eye[:, None, :, None] * w[None, :, None, :]).reshape(n * a, n * b)


def _pick_gb(G, S, L, k, gb_max, budget_bytes):
    """Slabs per grid step: amortize step overhead while staying inside a VMEM budget
    (conservative for v7x's 32 MiB scoped default) and keeping >= 2 grid steps when
    possible so v7x's two TensorCores both get work."""
    per_slab = 2 * (S * L * 4 + S * L * 4 + S * k * L * 2)     # hi + out (f32) + hj (bf16), x2 buffers
    fixed = 2 * (6 * S * S + 6 * L * L) * 2 + 2 * L * 4        # bf16 weight tiles + winf row, x2 buffers
    fixed += S * k * L * 6 + 12 * S * L * 4                    # rough in-kernel temporaries
    gb = min(gb_max, G, max(1, (budget_bytes - fixed) // per_slab))
    if G >= 2:
        gb = min(gb, pl.cdiv(G, 2))
    return max(1, int(gb))


def en_base_layer(h, nbr, p, *, lane_width=None, max_sub_tiles=None, gb_max=8,
                  vmem_block_budget=24 * 1024 * 1024):
    """One EnBaseLayer forward. h: (N, D, D) f32, nbr: (N, k) int32 kNN source ids."""
    N, D, _ = h.shape
    k = nbr.shape[1]
    assert D & (D - 1) == 0, "edge_inf roll butterfly needs power-of-two hidden_dim"

    if lane_width is None:
        lane_width = _default_lane_width()
    B = max(1, lane_width // D)              # nodes packed side-by-side along lanes
    if max_sub_tiles is None:
        max_sub_tiles = max(1, lane_width // D)

    T = pl.cdiv(N, B)                        # number of lane groups
    TB = min(max_sub_tiles, T)               # lane groups stacked along sublanes
    G = pl.cdiv(T, TB)                       # total slabs
    S, L = TB * D, B * D

    Gb = _pick_gb(G, S, L, k, gb_max, vmem_block_budget)
    Go = pl.cdiv(G, Gb)                      # grid size
    G_total = Go * Gb
    N_pad = G_total * TB * B

    if N_pad != N:                           # pad with dummy nodes (outputs discarded)
        h = jnp.concatenate([h, jnp.zeros((N_pad - N, D, D), h.dtype)], axis=0)
        nbr = jnp.concatenate([nbr, jnp.zeros((N_pad - N, k), nbr.dtype)], axis=0)

    # hi stays f32 (exact residual path); it is cast to bf16 in-kernel for the MXU.
    hi_packed = (h.reshape(G_total, TB, B, D, D)
                  .transpose(0, 1, 3, 2, 4)
                  .reshape(G_total, S, L))
    # neighbour features: one XLA gather in bf16 (halves gather + DMA traffic),
    # neighbours concatenated along lanes so the k left-multiplies fuse into one matmul.
    h_bf = h.astype(jnp.bfloat16)
    hj_packed = (h_bf[nbr]                                    # (N_pad, k, D, D)
                 .reshape(G_total, TB, B, k, D, D)
                 .transpose(0, 1, 4, 3, 2, 5)                 # (G, TB, D, k, B, D)
                 .reshape(G_total, S, k * L))

    # block-diagonal bf16 weights: left acts on sublane blocks, right on lane blocks
    def lr(w):
        return _bdiag(w, TB).astype(jnp.bfloat16), _bdiag(w.T, B).astype(jnp.bfloat16)

    l1a, r1a = lr(p["W1a"])
    l1b, r1b = lr(p["W1b"])
    l2, r2 = lr(p["W2"])
    lv1a, rv1a = lr(p["V1a"])
    lv1b, rv1b = lr(p["V1b"])
    lv2, rv2 = lr(p["V2"])
    wrow = jnp.tile(p["winf"][:, 0], B).reshape(1, L).astype(jnp.float32)
    binf = p["binf"].reshape(1).astype(jnp.float32)           # scalar bias -> SMEM

    def const_spec(shape):
        zeros = (0,) * len(shape)
        return pl.BlockSpec(shape, lambda g, z=zeros: z)

    kernel = functools.partial(_en_layer_kernel, k=k, D=D,
                               roll_np=_roll_is_np_convention())

    out_packed = pl.pallas_call(
        kernel,
        out_shape=jax.ShapeDtypeStruct((G_total, S, L), h.dtype),
        grid=(Go,),
        in_specs=[
            pl.BlockSpec((Gb, S, L), lambda g: (g, 0, 0)),        # hi (packed, f32)
            pl.BlockSpec((Gb, S, k * L), lambda g: (g, 0, 0)),    # hj (packed, bf16)
            const_spec((S, S)), const_spec((L, L)),               # W1a  left / right
            const_spec((S, S)), const_spec((L, L)),               # W1b
            const_spec((S, S)), const_spec((L, L)),               # W2
            const_spec((S, S)), const_spec((L, L)),               # V1a
            const_spec((S, S)), const_spec((L, L)),               # V1b
            const_spec((S, S)), const_spec((L, L)),               # V2
            const_spec((1, L)),                                   # winf lane row (f32)
            pl.BlockSpec(memory_space=pltpu.MemorySpace.SMEM),    # edge_inf bias scalar
        ],
        out_specs=pl.BlockSpec((Gb, S, L), lambda g: (g, 0, 0)),
        compiler_params=pltpu.CompilerParams(
            dimension_semantics=("parallel",),                    # dst slabs independent
            vmem_limit_bytes=48 * 1024 * 1024),                   # safe on v5e/v6e/v7x
    )(hi_packed, hj_packed,
      l1a, r1a, l1b, r1b, l2, r2, lv1a, rv1a, lv1b, rv1b, lv2, rv2,
      wrow, binf)

    # unpack (G_total, S, L) -> (N, D, D)
    h_new = (out_packed.reshape(G_total, TB, D, B, D)
             .transpose(0, 1, 3, 2, 4)
             .reshape(N_pad, D, D))[:N]
    return h_new


# ----------------------------------------------------------------------------
# Glue: knn_graph (batch aware, no self loops, flow='source_to_target'),
# parameter init, and the SPD_GNN driver loop.
# ----------------------------------------------------------------------------
def knn_neighbors(x, batch, k):
    """For each target node i, indices of its k nearest same-batch neighbours (sources)."""
    N = x.shape[0]
    d2 = jnp.sum((x[:, None, :] - x[None, :, :]) ** 2, axis=-1)
    valid = (batch[:, None] == batch[None, :]) & (~jnp.eye(N, dtype=bool))
    d2 = jnp.where(valid, d2, jnp.inf)
    _, idx = lax.top_k(-d2, k)                    # top_k instead of full argsort
    return idx.astype(jnp.int32)


def init_layer_params(key, D):
    ks = jax.random.split(key, 6)

    def scaled(k_, shape):
        return jax.random.normal(k_, shape, jnp.float32) / jnp.sqrt(float(shape[-1]))

    W1 = scaled(ks[0], (D, 2 * D))      # edge_mlp bilinear layer 1 (acts on blockdiag joint)
    W2 = scaled(ks[1], (D, D))          # edge_mlp bilinear layer 2
    winf = scaled(ks[2], (D, 1))        # edge_inf Linear(D, 1) weight
    binf = 0.1 * jax.random.normal(ks[3], (1,), jnp.float32)
    V1 = scaled(ks[4], (D, 2 * D))      # node_mlp (SPDMLP) bilinear layer 1
    V2 = scaled(ks[5], (D, D))          # node_mlp bilinear layer 2
    return dict(W1a=W1[:, :D], W1b=W1[:, D:], W2=W2, winf=winf, binf=binf,
                V1a=V1[:, :D], V1b=V1[:, D:], V2=V2)


def spd_gnn_forward(h, x, prot_batchs, layer_params, k, return_all=False):
    all_x = [x]
    all_h = [h]
    # x never changes inside EnBaseLayer.forward (x_mlp is unused there), so the kNN
    # graph is identical for every layer -> build it once.
    nbr = knn_neighbors(x, prot_batchs, k)
    for p in layer_params:
        h = en_base_layer(h, nbr, p)              # EnBaseLayer returns x unchanged
        all_x.append(x)
        all_h.append(h)
    outputs = {"x": x, "h": h}
    if return_all:
        outputs.update({"all_x": all_x, "all_h": all_h})
    return h, x, outputs


# ----------------------------------------------------------------------------
# Pure-JAX reference with the kernel's bf16-operand / f32-accumulate mixed precision
# (validates packing and W X W^T orientation, not dtype error).
# ----------------------------------------------------------------------------
def _layer_ref(h, nbr, p):
    bf16, f32 = jnp.bfloat16, jnp.float32

    def bimap(w, x_bf):
        wl = w.astype(bf16)
        t = jnp.einsum("ab,...bc->...ac", wl, x_bf, preferred_element_type=f32)
        return jnp.einsum("...ac,dc->...ad", t.astype(bf16), wl,
                          preferred_element_type=f32)

    hi_bf = h.astype(bf16)                               # (N, D, D)
    hj_bf = hi_bf[nbr]                                   # (N, k, D, D)
    m1 = jax.nn.relu(bimap(p["W1a"], hi_bf)[:, None] + bimap(p["W1b"], hj_bf))
    mij = jax.nn.relu(bimap(p["W2"], m1.astype(bf16)))
    logits = jnp.einsum("nkrc,c->nkr", mij, p["winf"][:, 0]) + p["binf"][0]
    eij = jax.nn.sigmoid(logits)[..., None]              # (N, k, D, 1)
    mi = jnp.sum(mij * eij, axis=1)
    n1 = jax.nn.relu(bimap(p["V1a"], mi.astype(bf16)) + bimap(p["V1b"], hi_bf))
    return h + bimap(p["V2"], n1.astype(bf16))


if __name__ == "__main__":
    key = jax.random.PRNGKey(0)
    num_layers, D, k = 2, 16, 4
    n_per_batch, n_batches = 12, 2
    N = n_per_batch * n_batches

    k_h, k_x, k_p = jax.random.split(key, 3)
    # Non-symmetric h: symmetric SPD inputs could mask packing / orientation bugs.
    h0 = jax.random.normal(k_h, (N, D, D), jnp.float32)
    x0 = jax.random.normal(k_x, (N, 3), jnp.float32)              # coordinates
    prot_batchs = jnp.repeat(jnp.arange(n_batches, dtype=jnp.int32), n_per_batch)

    layer_params = [init_layer_params(kk, D) for kk in jax.random.split(k_p, num_layers)]

    h_out, x_out, outputs = spd_gnn_forward(h0, x0, prot_batchs, layer_params, k)
    jax.block_until_ready(h_out)

    # cross-check against the bf16-matched pure-JAX reference
    nbr = knn_neighbors(x0, prot_batchs, k)
    h_ref = h0
    for p in layer_params:
        h_ref = _layer_ref(h_ref, nbr, p)
    np.testing.assert_allclose(np.asarray(h_out), np.asarray(h_ref), rtol=2e-3, atol=2e-3)
    assert x_out.shape == x0.shape and outputs["h"].shape == h0.shape

    print("KERNEL_OK")
</pallas_src>

<mosaic_0001>
module attributes {stable_mosaic.version = 11 : i64} {
  func.func @probe_kernel(%arg0: memref<1x128xf32, #tpu.memory_space<vmem>>, %arg1: memref<1x128xf32, #tpu.memory_space<vmem>>) attributes {dimension_semantics = [], scalar_prefetch = 0 : i64, scratch_operands = 0 : i64, tpu.core_type = #tpu.core_type<tc>} {
    %c0 = arith.constant 0 : index
    %c0_0 = arith.constant 0 : index
    %0 = vector.load %arg0[%c0, %c0_0] : memref<1x128xf32, #tpu.memory_space<vmem>>, vector<1x128xf32>
    %c1_i32 = arith.constant 1 : i32
    %1 = tpu.dynamic_rotate %0 by %c1_i32 dim 1 : vector<1x128xf32>, i32 -> vector<1x128xf32>
    %c0_1 = arith.constant 0 : index
    %c0_2 = arith.constant 0 : index
    %2 = vector.load %arg1[%c0_1, %c0_2] : memref<1x128xf32, #tpu.memory_space<vmem>>, vector<1x128xf32>
    tpu.vector_store %arg1[%c0_1, %c0_2], %1 {strides = array<i32>} : memref<1x128xf32, #tpu.memory_space<vmem>>, vector<1x128xf32>,
    return
  }
}

</mosaic_0001>

<llo_original>
// kernel: tpu_custom_call.1
$region0: #{tpu_custom_call.1}
  #allocation0 [shape = 'u32[]', space=smem, size = 0x4, offset = 0x4, fixed_abs, tag = 'smem constant byte address 0x4 - core index']
  #allocation1 [shape = 'u32[72,128]{1,0:T(1,128)}', space=vmem, size = 0x9000, scoped, tag = 'internal scratch']
  %s0 = inlined_call_operand.hbm [shape: f32[1,128], index: 0, kind: input, shape index: {}]
  %s1 = inlined_call_operand.hbm [shape: f32[1,128], index: 1, kind: output, shape index: {}]
  %s2 = sld [smem:[#allocation0]]
  $region18: #{tpu_custom_call.1} parent=0
    _
  %s4 = ssub.s32 1, %s2
  %s5 = scalar_select 0, %s4, %s2
  $region1: #{tpu_custom_call.1} parent=0
    #allocation2 [shape = 'u8[512]{0}', space=vmem, size = 0x400, scoped, tag = 'input window, operand 0, single buffered']
    #allocation3 [shape = 's32[1]{0}', space=sflag, size = 0x4, scoped, tag = 'scoped memory for tpu_custom_call.1']
    #allocation4 [shape = 's32[1]{0}', space=sflag, size = 0x4, scoped, tag = 'scoped memory for tpu_custom_call.1']
    #allocation5 [shape = 'u8[512]{0}', space=vmem, size = 0x400, scoped, tag = 'output window, operand 0, single buffered']
    %6 = vsyncpa [#allocation3], 0
    %7 = vsyncpa [#allocation4], 0
    // Predicated region
    $region2: #{tpu_custom_call.1} parent=1 // pred_check
      _
    $region3: #{tpu_custom_call.1} parent=1 // pred_check_branch
      %9 = sbr.rel (0) target = $region5
    $region4: #{tpu_custom_call.1} parent=1 // pred_region
      %11 = vsyncadd [#allocation3], 0
      %s13 = sshll.u32 %s0, 4
      %s14 = int_to_ptr.hbm [resolvable:$true] %s13
      %s15 = sshll.u32 [#allocation2], 4
      %s16 = int_to_ptr.vmem [resolvable:$true] %s15
      %18 = dma.hbm_to_vmem [thread:$0]  %s14, 16, %s16, [#allocation3]
    $region5: #{tpu_custom_call.1} parent=1 // pred_fallthru
      _
    // Predicated region
    $region6: #{tpu_custom_call.1} parent=1 // pred_check
      _
    $region7: #{tpu_custom_call.1} parent=1 // pred_check_branch
      %20 = sbr.rel (0) target = $region9
    $region8: #{tpu_custom_call.1} parent=1 // pred_region
      %22 = dma.done [#allocation3], 16
    $region9: #{tpu_custom_call.1} parent=1 // pred_fallthru
      _
    %v23 = vld [vmem:[#allocation2] sm:$0x1]
    %24 = vrot.lane.b32.xlu0 %v23, 1
    %v25 = vpop.permute.xlu0 %24
    %26 = vst [vmem:[#allocation5] sm:$0x1] %v25
    // Predicated region
    $region10: #{tpu_custom_call.1} parent=1 // pred_check
      _
    $region11: #{tpu_custom_call.1} parent=1 // pred_check_branch
      %28 = sbr.rel (0) target = $region13
    $region12: #{tpu_custom_call.1} parent=1 // pred_region
      %30 = vsyncadd [#allocation4], 0
      %s32 = sshll.u32 [#allocation5], 4
      %s33 = int_to_ptr.vmem [resolvable:$true] %s32
      %s34 = sshll.u32 %s1, 4
      %s35 = int_to_ptr.hbm [resolvable:$true] %s34
      %37 = dma.vmem_to_hbm [thread:$0]  %s33, 16, %s35, [#allocation4]
    $region13: #{tpu_custom_call.1} parent=1 // pred_fallthru
      _
    // Predicated region
    $region14: #{tpu_custom_call.1} parent=1 // pred_check
      _
    $region15: #{tpu_custom_call.1} parent=1 // pred_check_branch
      %39 = sbr.rel (0) target = $region17
    $region16: #{tpu_custom_call.1} parent=1 // pred_region
      %41 = dma.done [#allocation4], 16
    $region17: #{tpu_custom_call.1} parent=1 // pred_fallthru
      _
    %42 = vsyncpa [#allocation3], 1
    %43 = vsyncpa [#allocation4], 1

</llo_original>
